<compile_context>
chip_gen: v5e
topology: v5e:2x2
jax: 0.10.0
libtpu: 0.0.40
codegen_flags: <defaults>
</compile_context>

<pallas_src>
import math
import numpy as np
import jax
import jax.numpy as jnp
from jax.experimental import pallas as pl
from jax.experimental.pallas import tpu as pltpu

HIGHEST = jax.lax.Precision.HIGHEST


# ---------------------------------------------------------------------------
# Pallas kernel
# ---------------------------------------------------------------------------
def build_kernel(num_hidden, use_layer_stitch):
    """Kernel body: chain of packed lane-dense matmuls.

    refs layout:
      x_ref                       [Bb, D0]
      W_refs (num_hidden+1)       layer 0: [D0, T*H0]; deeper: [T*Din, T*Dout]
                                  (cross-stitch mix pre-folded for hidden layers)
      b_refs (num_hidden+1)       each [1, T*Dout]  (mix pre-folded for hidden)
      beta_ref (optional, SMEM)   [num_hidden]  softmax(beta)
      out_ref                     [Bb, T*D_last]
    """

    def kernel(*refs):
        idx = 0
        x_ref = refs[idx]; idx += 1
        W_refs = refs[idx: idx + num_hidden + 1]; idx += num_hidden + 1
        b_refs = refs[idx: idx + num_hidden + 1]; idx += num_hidden + 1
        if use_layer_stitch:
            beta_ref = refs[idx]; idx += 1
        out_ref = refs[idx]

        h = x_ref[...]
        acc = None
        for i in range(num_hidden):
            # packed per-task linear (+ folded cross-stitch), then ReLU
            h = jnp.dot(h, W_refs[i][...], preferred_element_type=jnp.float32)
            h = jnp.maximum(h + b_refs[i][...], 0.0)
            if use_layer_stitch:
                contrib = beta_ref[i] * h          # scalar (SMEM) * vreg tile
                acc = contrib if acc is None else acc + contrib

        pre = acc if use_layer_stitch else h
        # final packed per-task linear (no cross-stitch / relu)
        y = jnp.dot(pre, W_refs[num_hidden][...],
                    preferred_element_type=jnp.float32)
        out_ref[...] = (y + b_refs[num_hidden][...]).astype(out_ref.dtype)

    return kernel


# ---------------------------------------------------------------------------
# Wrapper: parameter repacking / mixing-matrix folding + pallas_call
# ---------------------------------------------------------------------------
def _block_diag(mats):
    t = len(mats)
    din, dout = mats[0].shape
    out = jnp.zeros((t * din, t * dout), mats[0].dtype)
    for i, m in enumerate(mats):
        out = out.at[i * din:(i + 1) * din, i * dout:(i + 1) * dout].set(m)
    return out


def _mix_matrix(alpha, H, T, S):
    """Dense cross-stitch mixing matrix M [T*H, T*H] so that in the packed
    task-major layout p = t*H + s*ss + c we have  h_packed @ M == stitch(h)."""
    ss = H // S
    ST = S * T
    N = T * H
    A = jax.nn.softmax(alpha, axis=0)                         # [ST, ST]

    p = np.arange(N)
    t = p // H
    s = (p % H) // ss
    key = s * T + t                                           # [N] -> S*T index
    Q = jnp.asarray((key[:, None] == np.arange(ST)[None, :]).astype(np.float32))
    A_exp = jnp.matmul(jnp.matmul(Q, A, precision=HIGHEST), Q.T,
                       precision=HIGHEST)                     # [N, N]

    c = p % ss
    cmask = jnp.asarray((c[:, None] == c[None, :]).astype(np.float32))
    return A_exp * cmask


def mtl_net_cs_forward(x, params, *, layer_sizes, num_tasks, num_subspaces,
                       use_layer_stitch):
    B, D0 = x.shape
    T, S, L = num_tasks, num_subspaces, len(layer_sizes)
    D_last = layer_sizes[-1]
    num_hidden = L - 1

    for h in layer_sizes[:-1]:
        assert h % S == 0, "layer size not divisible into subspaces"
    if use_layer_stitch:
        assert len(set(layer_sizes[:-1])) == 1, \
            "layer-stitch requires equal hidden layer sizes"

    # --- parameter repacking: PyTorch [Dout, Din, T] -> packed lane-dense,
    #     with the cross-stitch mixing matrix folded into hidden layers ------
    Wf, bf = [], []
    for i in range(L):
        W = params["W"][i]                                 # [Dout, Din, T]
        b = params["b"][i]                                 # [Dout, T]
        per_task = [W[:, :, t].T for t in range(T)]        # each [Din, Dout]
        if i == 0:
            Wp = jnp.concatenate(per_task, axis=1)         # [D0, T*H0] (x shared)
        else:
            Wp = _block_diag(per_task)                     # [T*Din, T*Dout]
        bp = b.T.reshape(1, -1)                            # [1, T*Dout]
        if i < num_hidden:
            M = _mix_matrix(params["alphas"][i], layer_sizes[i], T, S)
            Wp = jnp.matmul(Wp, M, precision=HIGHEST)
            bp = jnp.matmul(bp, M, precision=HIGHEST)
        Wf.append(Wp)
        bf.append(bp)

    inputs = [x] + Wf + bf

    # batch grid ("parallel" -> both TensorCores on v7x when B is large)
    block_b = B if B <= 512 else 512
    assert B % block_b == 0
    grid = (B // block_b,)

    in_specs = [pl.BlockSpec((block_b, D0), lambda i: (i, 0))]
    in_specs += [pl.BlockSpec(w.shape, lambda i: (0, 0)) for w in Wf]
    in_specs += [pl.BlockSpec(bb.shape, lambda i: (0, 0)) for bb in bf]
    if use_layer_stitch:
        beta_sm = jax.nn.softmax(params["betas"], axis=0).astype(jnp.float32)
        inputs.append(beta_sm)                             # [num_hidden] scalars
        in_specs.append(pl.BlockSpec(memory_space=pltpu.MemorySpace.SMEM))

    out_spec = pl.BlockSpec((block_b, T * D_last), lambda i: (i, 0))

    kernel = build_kernel(num_hidden, use_layer_stitch)
    out = pl.pallas_call(
        kernel,
        out_shape=jax.ShapeDtypeStruct((B, T * D_last), jnp.float32),
        grid=grid,
        in_specs=in_specs,
        out_specs=out_spec,
        compiler_params=pltpu.CompilerParams(dimension_semantics=("parallel",)),
    )(*inputs)

    # packed [B, T*D_last] -> PyTorch layout [B, D_last, T]
    return jnp.transpose(out.reshape(B, T, D_last), (0, 2, 1))


# ---------------------------------------------------------------------------
# Pure-JAX reference (direct translation of the PyTorch forward) for checking
# ---------------------------------------------------------------------------
def reference_forward(x, params, *, layer_sizes, num_tasks, num_subspaces,
                      use_layer_stitch):
    T, S, L = num_tasks, num_subspaces, len(layer_sizes)
    xt = jnp.stack([x] * T, axis=-1)                                # [B, D0, T]
    xs = []
    for i in range(L - 1):
        W, b = params["W"][i], params["b"][i]
        xt = jnp.einsum("bit,jit->bjt", xt, W, precision=HIGHEST) + b
        ss = layer_sizes[i] // S
        parts = [xt[:, s * ss:(s + 1) * ss, :] for s in range(S)]
        xcat = jnp.concatenate(parts, axis=2)                       # [B, ss, S*T]
        A = jax.nn.softmax(params["alphas"][i], axis=0)
        xcat = jnp.matmul(xcat, A, precision=HIGHEST)
        parts2 = [xcat[:, :, s * T:(s + 1) * T] for s in range(S)]
        xt = jnp.concatenate(parts2, axis=1)
        xt = jnp.maximum(xt, 0.0)
        xs.append(xt)
    if use_layer_stitch:
        bsm = jax.nn.softmax(params["betas"], axis=0)
        xt = jnp.einsum("bhtl,l->bht", jnp.stack(xs, axis=-1), bsm,
                        precision=HIGHEST)
    W, b = params["W"][L - 1], params["b"][L - 1]
    xt = jnp.einsum("bit,jit->bjt", xt, W, precision=HIGHEST) + b
    return xt


# ---------------------------------------------------------------------------
# Deterministic parameter construction (mirrors MTL_Net_CS.__init__)
# ---------------------------------------------------------------------------
def init_params(num_inputs, layer_sizes, num_tasks, num_subspaces,
                alpha_init, beta_init, use_layer_stitch, key):
    L = len(layer_sizes)
    T, S = num_tasks, num_subspaces
    keys = jax.random.split(key, 2 * L)
    W, b = [], []
    prev = num_inputs
    for i, h in enumerate(layer_sizes):
        bound = 1.0 / math.sqrt(prev)
        w2d = jax.random.uniform(keys[2 * i], (h, prev), jnp.float32,
                                 -bound, bound)
        b1d = jax.random.uniform(keys[2 * i + 1], (h,), jnp.float32,
                                 -bound, bound)
        # same weights stacked across tasks, like the PyTorch module
        W.append(jnp.stack([w2d] * T, axis=-1))                     # [h, prev, T]
        b.append(jnp.stack([b1d] * T, axis=-1))                     # [h, T]
        prev = h

    alphas = []
    for _ in range(L - 1):
        if alpha_init == "imbalanced":
            if S == 1:
                a = np.full((T, T), 0.1 / (T - 1), dtype=np.float32)
                np.fill_diagonal(a, 0.9)
            else:
                a = np.array([[0.95, 0.05], [0.05, 0.95]], dtype=np.float32)
                a = a.repeat(T, axis=0).repeat(T, axis=1)
        else:  # balanced
            a = np.full((T * S, T * S), 1.0 / (T * S), dtype=np.float32)
        alphas.append(jnp.asarray(a))

    params = {"W": W, "b": b, "alphas": alphas}
    if use_layer_stitch:
        nl = L - 1
        if beta_init == "imbalanced":
            betas = np.full(nl, 0.1 / (nl - 1), dtype=np.float32)
            betas[-1] = 0.9
        else:
            betas = np.full(nl, 1.0 / nl, dtype=np.float32)
        params["betas"] = jnp.asarray(betas)
    return params


if __name__ == "__main__":
    # small config consistent with the module
    B = 8
    num_inputs = 16
    layer_sizes = [32, 32, 8]        # equal hidden sizes so layer-stitch stacks
    num_tasks = 2
    num_subspaces = 2
    use_layer_stitch = True
    alpha_init = "imbalanced"
    beta_init = "imbalanced"

    key = jax.random.PRNGKey(0)
    kx, kp = jax.random.split(key)
    x = jax.random.normal(kx, (B, num_inputs), jnp.float32)
    params = init_params(num_inputs, layer_sizes, num_tasks, num_subspaces,
                         alpha_init, beta_init, use_layer_stitch, kp)

    out = mtl_net_cs_forward(
        x, params, layer_sizes=layer_sizes, num_tasks=num_tasks,
        num_subspaces=num_subspaces, use_layer_stitch=use_layer_stitch)
    out = jax.block_until_ready(out)

    ref = reference_forward(
        x, params, layer_sizes=layer_sizes, num_tasks=num_tasks,
        num_subspaces=num_subspaces, use_layer_stitch=use_layer_stitch)
    ref = jax.block_until_ready(ref)

    assert out.shape == (B, layer_sizes[-1], num_tasks), out.shape
    # Kernel uses default MXU precision (f32 accumulate) vs. the HIGHEST-
    # precision reference, hence the relaxed tolerance.
    np.testing.assert_allclose(np.asarray(out), np.asarray(ref),
                               rtol=2e-2, atol=5e-2)
    print("KERNEL_OK")
</pallas_src>

<mosaic_0001>
module attributes {stable_mosaic.version = 11 : i64} {
  func.func @kernel(%arg0: i32, %arg1: memref<8x16xf32, #tpu.memory_space<vmem>>, %arg2: memref<16x64xf32, #tpu.memory_space<vmem>>, %arg3: memref<64x64xf32, #tpu.memory_space<vmem>>, %arg4: memref<64x16xf32, #tpu.memory_space<vmem>>, %arg5: memref<1x64xf32, #tpu.memory_space<vmem>>, %arg6: memref<1x64xf32, #tpu.memory_space<vmem>>, %arg7: memref<1x16xf32, #tpu.memory_space<vmem>>, %arg8: memref<2xf32, #tpu.memory_space<smem>>, %arg9: memref<8x16xf32, #tpu.memory_space<vmem>>) attributes {dimension_semantics = [#tpu.dimension_semantics<parallel>], iteration_bounds = array<i64: 1>, scalar_prefetch = 0 : i64, scratch_operands = 0 : i64, tpu.core_type = #tpu.core_type<tc>, window_params = [{transform_indices = @transform_0, window_bounds = array<i64: 8, 16>}, {pipeline_mode = #tpu.pipeline_mode<synchronous>, transform_indices = @transform_1, window_bounds = array<i64: 16, 64>}, {pipeline_mode = #tpu.pipeline_mode<synchronous>, transform_indices = @transform_2, window_bounds = array<i64: 64, 64>}, {pipeline_mode = #tpu.pipeline_mode<synchronous>, transform_indices = @transform_3, window_bounds = array<i64: 64, 16>}, {pipeline_mode = #tpu.pipeline_mode<synchronous>, transform_indices = @transform_4, window_bounds = array<i64: 1, 64>}, {pipeline_mode = #tpu.pipeline_mode<synchronous>, transform_indices = @transform_5, window_bounds = array<i64: 1, 64>}, {pipeline_mode = #tpu.pipeline_mode<synchronous>, transform_indices = @transform_6, window_bounds = array<i64: 1, 16>}, {transform_indices = @transform_7, window_bounds = array<i64: 2>}, {transform_indices = @transform_8, window_bounds = array<i64: 8, 16>}]} {
    %c0 = arith.constant 0 : index
    %c0_0 = arith.constant 0 : index
    %0 = vector.load %arg1[%c0, %c0_0] : memref<8x16xf32, #tpu.memory_space<vmem>>, vector<8x16xf32>
    %c0_1 = arith.constant 0 : index
    %c0_2 = arith.constant 0 : index
    %1 = vector.load %arg2[%c0_1, %c0_2] : memref<16x64xf32, #tpu.memory_space<vmem>>, vector<16x64xf32>
    %cst = arith.constant dense<0.000000e+00> : vector<8x64xf32>
    %2 = tpu.matmul %0, %1, %cst {dimension_numbers = #tpu.dot_dimension_numbers<[1], [0], [0], [1], [0, 0, 1, 1], [], []>} : vector<8x16xf32>, vector<16x64xf32>, vector<8x64xf32> -> vector<8x64xf32>
    %c0_3 = arith.constant 0 : index
    %c0_4 = arith.constant 0 : index
    %3 = vector.load %arg5[%c0_3, %c0_4] : memref<1x64xf32, #tpu.memory_space<vmem>>, vector<1x64xf32>
    %4 = vector.broadcast %3 : vector<1x64xf32> to vector<8x64xf32>
    %5 = arith.addf %2, %4 : vector<8x64xf32>
    %cst_5 = arith.constant 0.000000e+00 : f32
    %6 = vector.broadcast %cst_5 : f32 to vector<8x64xf32>
    %7 = arith.maximumf %5, %6 : vector<8x64xf32>
    %c0_6 = arith.constant 0 : index
    %8 = memref.load %arg8[%c0_6] : memref<2xf32, #tpu.memory_space<smem>>
    %9 = vector.broadcast %8 : f32 to vector<8x64xf32>
    %10 = arith.mulf %9, %7 : vector<8x64xf32>
    %c0_7 = arith.constant 0 : index
    %c0_8 = arith.constant 0 : index
    %11 = vector.load %arg3[%c0_7, %c0_8] : memref<64x64xf32, #tpu.memory_space<vmem>>, vector<64x64xf32>
    %cst_9 = arith.constant dense<0.000000e+00> : vector<8x64xf32>
    %12 = tpu.matmul %7, %11, %cst_9 {dimension_numbers = #tpu.dot_dimension_numbers<[1], [0], [0], [1], [0, 0, 1, 1], [], []>} : vector<8x64xf32>, vector<64x64xf32>, vector<8x64xf32> -> vector<8x64xf32>
    %c0_10 = arith.constant 0 : index
    %c0_11 = arith.constant 0 : index
    %13 = vector.load %arg6[%c0_10, %c0_11] : memref<1x64xf32, #tpu.memory_space<vmem>>, vector<1x64xf32>
    %14 = vector.broadcast %13 : vector<1x64xf32> to vector<8x64xf32>
    %15 = arith.addf %12, %14 : vector<8x64xf32>
    %cst_12 = arith.constant 0.000000e+00 : f32
    %16 = vector.broadcast %cst_12 : f32 to vector<8x64xf32>
    %17 = arith.maximumf %15, %16 : vector<8x64xf32>
    %c1 = arith.constant 1 : index
    %18 = memref.load %arg8[%c1] : memref<2xf32, #tpu.memory_space<smem>>
    %19 = vector.broadcast %18 : f32 to vector<8x64xf32>
    %20 = arith.mulf %19, %17 : vector<8x64xf32>
    %21 = arith.addf %10, %20 : vector<8x64xf32>
    %c0_13 = arith.constant 0 : index
    %c0_14 = arith.constant 0 : index
    %22 = vector.load %arg4[%c0_13, %c0_14] : memref<64x16xf32, #tpu.memory_space<vmem>>, vector<64x16xf32>
    %cst_15 = arith.constant dense<0.000000e+00> : vector<8x16xf32>
    %23 = tpu.matmul %21, %22, %cst_15 {dimension_numbers = #tpu.dot_dimension_numbers<[1], [0], [0], [1], [0, 0, 1, 1], [], []>} : vector<8x64xf32>, vector<64x16xf32>, vector<8x16xf32> -> vector<8x16xf32>
    %c0_16 = arith.constant 0 : index
    %c0_17 = arith.constant 0 : index
    %24 = vector.load %arg7[%c0_16, %c0_17] : memref<1x16xf32, #tpu.memory_space<vmem>>, vector<1x16xf32>
    %25 = vector.broadcast %24 : vector<1x16xf32> to vector<8x16xf32>
    %26 = arith.addf %23, %25 : vector<8x16xf32>
    %c0_18 = arith.constant 0 : index
    %c0_19 = arith.constant 0 : index
    %27 = vector.load %arg9[%c0_18, %c0_19] : memref<8x16xf32, #tpu.memory_space<vmem>>, vector<8x16xf32>
    tpu.vector_store %arg9[%c0_18, %c0_19], %26 {strides = array<i32>} : memref<8x16xf32, #tpu.memory_space<vmem>>, vector<8x16xf32>,
    return
  }
  func.func @transform_0(%arg0: i32) -> (i32, i32) {
    %c0_i32 = arith.constant 0 : i32
    %c0_i32_0 = arith.constant 0 : i32
    return %arg0, %c0_i32 : i32, i32
  }
  func.func @transform_1(%arg0: i32) -> (i32, i32) {
    %c0_i32 = arith.constant 0 : i32
    %c0_i32_0 = arith.constant 0 : i32
    %c0_i32_1 = arith.constant 0 : i32
    return %c0_i32, %c0_i32_0 : i32, i32
  }
  func.func @transform_2(%arg0: i32) -> (i32, i32) {
    %c0_i32 = arith.constant 0 : i32
    %c0_i32_0 = arith.constant 0 : i32
    %c0_i32_1 = arith.constant 0 : i32
    return %c0_i32, %c0_i32_0 : i32, i32
  }
  func.func @transform_3(%arg0: i32) -> (i32, i32) {
    %c0_i32 = arith.constant 0 : i32
    %c0_i32_0 = arith.constant 0 : i32
    %c0_i32_1 = arith.constant 0 : i32
    return %c0_i32, %c0_i32_0 : i32, i32
  }
  func.func @transform_4(%arg0: i32) -> (i32, i32) {
    %c0_i32 = arith.constant 0 : i32
    %c0_i32_0 = arith.constant 0 : i32
    %c0_i32_1 = arith.constant 0 : i32
    return %c0_i32, %c0_i32_0 : i32, i32
  }
  func.func @transform_5(%arg0: i32) -> (i32, i32) {
    %c0_i32 = arith.constant 0 : i32
    %c0_i32_0 = arith.constant 0 : i32
    %c0_i32_1 = arith.constant 0 : i32
    return %c0_i32, %c0_i32_0 : i32, i32
  }
  func.func @transform_6(%arg0: i32) -> (i32, i32) {
    %c0_i32 = arith.constant 0 : i32
    %c0_i32_0 = arith.constant 0 : i32
    %c0_i32_1 = arith.constant 0 : i32
    return %c0_i32, %c0_i32_0 : i32, i32
  }
  func.func @transform_7(%arg0: i32) -> i32 {
    %c0_i32 = arith.constant 0 : i32
    %c0_i32_0 = arith.constant 0 : i32
    return %c0_i32 : i32
  }
  func.func @transform_8(%arg0: i32) -> (i32, i32) {
    %c0_i32 = arith.constant 0 : i32
    %c0_i32_0 = arith.constant 0 : i32
    return %arg0, %c0_i32 : i32, i32
  }
}

</mosaic_0001>

<llo_original>
// kernel: tpu_custom_call.1
$region0: #{tpu_custom_call.1}
  #allocation0 [shape = 'u32[]', space=smem, size = 0x4, offset = 0x4, fixed_abs, tag = 'smem constant byte address 0x4 - core index']
  #allocation1 [shape = 'u32[72,128]{1,0:T(1,128)}', space=vmem, size = 0x9000, scoped, tag = 'internal scratch']
  %s0 = inlined_call_operand.hbm [shape: f32[8,16], index: 0, kind: input, shape index: {}]
  %s1 = inlined_call_operand.vmem [shape: f32[16,64], index: 1, kind: input, shape index: {}]
  %s2 = inlined_call_operand.vmem [shape: f32[64,64], index: 2, kind: input, shape index: {}]
  %s3 = inlined_call_operand.vmem [shape: f32[64,16], index: 3, kind: input, shape index: {}]
  %s4 = inlined_call_operand.vmem [shape: f32[1,64], index: 4, kind: input, shape index: {}]
  %s5 = inlined_call_operand.vmem [shape: f32[1,64], index: 5, kind: input, shape index: {}]
  %s6 = inlined_call_operand.vmem [shape: f32[1,16], index: 6, kind: input, shape index: {}]
  %s7 = inlined_call_operand.vmem [shape: f32[2], index: 7, kind: input, shape index: {}]
  %s8 = inlined_call_operand.hbm [shape: f32[8,16], index: 8, kind: output, shape index: {}]
  %s9 = sld [smem:[#allocation0]]
  $region50: #{tpu_custom_call.1} parent=0
    _
  %s11 = ssub.s32 1, %s9
  %s12 = scalar_select 0, %s11, %s9
  $region1: #{tpu_custom_call.1} parent=0
    #allocation2 [shape = 'u8[4096]{0}', space=vmem, size = 0x1000, scoped, tag = 'input window, operand 0, single buffered']
    #allocation3 [shape = 's32[1]{0}', space=sflag, size = 0x4, scoped, tag = 'scoped memory for tpu_custom_call.1']
    #allocation4 [shape = 's32[1]{0}', space=sflag, size = 0x4, scoped, tag = 'scoped memory for tpu_custom_call.1']
    #allocation5 [shape = 's32[1]{0}', space=sflag, size = 0x4, scoped, tag = 'scoped memory for tpu_custom_call.1']
    #allocation6 [shape = 'u8[512]{0}', space=smem, size = 0x200, scoped, tag = 'input window, operand 7, single buffered']
    #allocation7 [shape = 'u8[4096]{0}', space=vmem, size = 0x1000, scoped, tag = 'output window, operand 0, single buffered']
    %13 = vsyncpa [#allocation3], 0
    %14 = vsyncpa [#allocation5], 0
    %15 = vsyncpa [#allocation4], 0
    // Predicated region
    $region2: #{tpu_custom_call.1} parent=1 // pred_check
      _
    $region3: #{tpu_custom_call.1} parent=1 // pred_check_branch
      %17 = sbr.rel (0) target = $region5
    $region4: #{tpu_custom_call.1} parent=1 // pred_region
      %19 = vsyncadd [#allocation3], 0
      %s21 = sshll.u32 %s0, 4
      %s22 = int_to_ptr.hbm [resolvable:$true] %s21
      %s23 = sshll.u32 [#allocation2], 4
      %s24 = int_to_ptr.vmem [resolvable:$true] %s23
      %26 = dma.hbm_to_vmem [thread:$0]  %s22, 128, %s24, [#allocation3]
    $region5: #{tpu_custom_call.1} parent=1 // pred_fallthru
      _
    // Predicated region
    $region6: #{tpu_custom_call.1} parent=1 // pred_check
      _
    $region7: #{tpu_custom_call.1} parent=1 // pred_check_branch
      %28 = sbr.rel (0) target = $region9
    $region8: #{tpu_custom_call.1} parent=1 // pred_region
      _
    $region9: #{tpu_custom_call.1} parent=1 // pred_fallthru
      _
    // Predicated region
    $region10: #{tpu_custom_call.1} parent=1 // pred_check
      _
    $region11: #{tpu_custom_call.1} parent=1 // pred_check_branch
      %30 = sbr.rel (0) target = $region13
    $region12: #{tpu_custom_call.1} parent=1 // pred_region
      _
    $region13: #{tpu_custom_call.1} parent=1 // pred_fallthru
      _
    // Predicated region
    $region14: #{tpu_custom_call.1} parent=1 // pred_check
      _
    $region15: #{tpu_custom_call.1} parent=1 // pred_check_branch
      %32 = sbr.rel (0) target = $region17
    $region16: #{tpu_custom_call.1} parent=1 // pred_region
      _
    $region17: #{tpu_custom_call.1} parent=1 // pred_fallthru
      _
    // Predicated region
    $region18: #{tpu_custom_call.1} parent=1 // pred_check
      _
    $region19: #{tpu_custom_call.1} parent=1 // pred_check_branch
      %34 = sbr.rel (0) target = $region21
    $region20: #{tpu_custom_call.1} parent=1 // pred_region
      _
    $region21: #{tpu_custom_call.1} parent=1 // pred_fallthru
      _
    // Predicated region
    $region22: #{tpu_custom_call.1} parent=1 // pred_check
      _
    $region23: #{tpu_custom_call.1} parent=1 // pred_check_branch
      %36 = sbr.rel (0) target = $region25
    $region24: #{tpu_custom_call.1} parent=1 // pred_region
      _
    $region25: #{tpu_custom_call.1} parent=1 // pred_fallthru
      _
    // Predicated region
    $region26: #{tpu_custom_call.1} parent=1 // pred_check
      _
    $region27: #{tpu_custom_call.1} parent=1 // pred_check_branch
      %38 = sbr.rel (0) target = $region29
    $region28: #{tpu_custom_call.1} parent=1 // pred_region
      _
    $region29: #{tpu_custom_call.1} parent=1 // pred_fallthru
      _
    // Predicated region
    $region30: #{tpu_custom_call.1} parent=1 // pred_check
      _
    $region31: #{tpu_custom_call.1} parent=1 // pred_check_branch
      %40 = sbr.rel (0) target = $region33
    $region32: #{tpu_custom_call.1} parent=1 // pred_region
      %42 = vsyncadd [#allocation5], 0
      %s44 = sshll.u32 %s7, 4
      %s45 = int_to_ptr.vmem [resolvable:$true] %s44
      %47 = dma.vmem_to_smem %s45, 16, [#allocation6], [#allocation5]
    $region33: #{tpu_custom_call.1} parent=1 // pred_fallthru
      _
    // Predicated region
    $region34: #{tpu_custom_call.1} parent=1 // pred_check
      _
    $region35: #{tpu_custom_call.1} parent=1 // pred_check_branch
      %49 = sbr.rel (0) target = $region37
    $region36: #{tpu_custom_call.1} parent=1 // pred_region
      %51 = dma.done [#allocation3], 128
    $region37: #{tpu_custom_call.1} parent=1 // pred_fallthru
      _
    // Predicated region
    $region38: #{tpu_custom_call.1} parent=1 // pred_check
      _
    $region39: #{tpu_custom_call.1} parent=1 // pred_check_branch
      %53 = sbr.rel (0) target = $region41
    $region40: #{tpu_custom_call.1} parent=1 // pred_region
      %55 = dma.done [#allocation5], 16
    $region41: #{tpu_custom_call.1} parent=1 // pred_fallthru
      _
    %56 = sfence
    %v57 = vld [vmem:[#allocation2] sm:$0xff]
    %v58 = vld [vmem:[%s1] sm:$0xff]
    %v59 = vld [vmem:[%s1 + $0x8] sm:$0xff]
    %v60 = vld [vmem:[%s4] sm:$0x1]
    %v62 = vperm.slane %v60, 0
    %vm64 = vcmask 130048
    %v66 = vsel %vm64, %v57, 0
    %68 = vmatpush.msra.mxu0 0.0
    %69 = vmatpush.msra.mxu0 0.0
    %70 = vmatpush.msra.mxu0 0.0
    %71 = vmatpush.msra.mxu0 0.0
    %72 = vmatpush.msra.mxu0 0.0
    %73 = vmatpush.msra.mxu0 0.0
    %74 = vmatpush.msra.mxu0 0.0
    %75 = vmatpush.msra.mxu0 0.0
    %76 = vmatpush.msra.mxu0 0.0
    %77 = vmatpush.msra.mxu0 0.0
    %78 = vmatpush.msra.mxu0 0.0
    %79 = vmatpush.msra.mxu0 0.0
    %80 = vmatpush.msra.mxu0 0.0
    %81 = vmatpush.msra.mxu0 0.0
    %82 = vmatpush.msra.mxu0 %v59
    %83 = vmatpush.msra.mxu0 %v58
    %84 = vmatmul.f32.gmra.mxu0 %v66
    %v85 = vpop.f32.mrf.mxu0
    %v86 = vadd.f32 %v62, %v85
    %87 = vdwg.mxu0
    %v88 = vmax.f32 %v86, 0.0
    %s89 = sld [smem:[#allocation6]]
    %v90 = vstv %s89
    %v91 = vmul.f32 %v90, %v88
    %v92 = vld [vmem:[%s2] sm:$0xff]
    %v93 = vld [vmem:[%s2 + $0x8] sm:$0xff]
    %v94 = vld [vmem:[%s2 + $0x10] sm:$0xff]
    %v95 = vld [vmem:[%s2 + $0x18] sm:$0xff]
    %v96 = vld [vmem:[%s2 + $0x20] sm:$0xff]
    %v97 = vld [vmem:[%s2 + $0x28] sm:$0xff]
    %v98 = vld [vmem:[%s2 + $0x30] sm:$0xff]
    %v99 = vld [vmem:[%s2 + $0x38] sm:$0xff]
    %v100 = vld [vmem:[%s5] sm:$0x1]
    %v102 = vperm.slane %v100, 0
    %vm104 = vcmask 523264
    %v106 = vsel %vm104, %v88, 0
    %108 = vmatpush.msra.mxu0 0.0
    %109 = vmatpush.msra.mxu0 0.0
    %110 = vmatpush.msra.mxu0 0.0
    %111 = vmatpush.msra.mxu0 0.0
    %112 = vmatpush.msra.mxu0 0.0
    %113 = vmatpush.msra.mxu0 0.0
    %114 = vmatpush.msra.mxu0 0.0
    %115 = vmatpush.msra.mxu0 0.0
    %116 = vmatpush.msra.mxu0 %v99
    %117 = vmatpush.msra.mxu0 %v98
    %118 = vmatpush.msra.mxu0 %v97
    %119 = vmatpush.msra.mxu0 %v96
    %120 = vmatpush.msra.mxu0 %v95
    %121 = vmatpush.msra.mxu0 %v94
    %122 = vmatpush.msra.mxu0 %v93
    %123 = vmatpush.msra.mxu0 %v92
    %124 = vmatmul.f32.gmra.mxu0 %v106
    %v125 = vpop.f32.mrf.mxu0
    %v126 = vadd.f32 %v102, %v125
    %127 = vdwg.mxu0
    %v128 = vmax.f32 %v126, 0.0
    %s129 = sld [smem:[#allocation6 + $0x1]]
    %v130 = vstv %s129
    %v131 = vmul.f32 %v130, %v128
    %v132 = vadd.f32 %v91, %v131
    %v133 = vld [vmem:[%s3] sm:$0xff]
    %v134 = vld [vmem:[%s3 + $0x8] sm:$0xff]
    %v135 = vld [vmem:[%s3 + $0x10] sm:$0xff]
    %v136 = vld [vmem:[%s3 + $0x18] sm:$0xff]
    %v137 = vld [vmem:[%s3 + $0x20] sm:$0xff]
    %v138 = vld [vmem:[%s3 + $0x28] sm:$0xff]
    %v139 = vld [vmem:[%s3 + $0x30] sm:$0xff]
    %v140 = vld [vmem:[%s3 + $0x38] sm:$0xff]
    %v141 = vld [vmem:[%s6] sm:$0x1]
    %v143 = vperm.slane %v141, 0
    %v146 = vsel %vm104, %v132, 0
    %148 = vmatpush.msra.mxu0 0.0
    %149 = vmatpush.msra.mxu0 0.0
    %150 = vmatpush.msra.mxu0 0.0
    %151 = vmatpush.msra.mxu0 0.0
    %152 = vmatpush.msra.mxu0 0.0
    %153 = vmatpush.msra.mxu0 0.0
    %154 = vmatpush.msra.mxu0 0.0
    %155 = vmatpush.msra.mxu0 0.0
    %156 = vmatpush.msra.mxu0 %v140
    %157 = vmatpush.msra.mxu0 %v139
    %158 = vmatpush.msra.mxu0 %v138
    %159 = vmatpush.msra.mxu0 %v137
    %160 = vmatpush.msra.mxu0 %v136
    %161 = vmatpush.msra.mxu0 %v135
    %162 = vmatpush.msra.mxu0 %v134
    %163 = vmatpush.msra.mxu0 %v133
    %164 = vmatmul.f32.gmra.mxu0 %v146
    %v165 = vpop.f32.mrf.mxu0
    %v166 = vadd.f32 %v143, %v165
    %167 = vdwg.mxu0
    %168 = vst.msk [vmem:[#allocation7] sm:$0xff] %vm64, %v166
    // Predicated region
    $region42: #{tpu_custom_call.1} parent=1 // pred_check
      _
    $region43: #{tpu_custom_call.1} parent=1 // pred_check_branch
      %170 = sbr.rel (0) target = $region45
    $region44: #{tpu_custom_call.1} parent=1 // pred_region
      %172 = vsyncadd [#allocation4], 0
      %s174 = sshll.u32 [#allocation7], 4
      %s175 = int_to_ptr.vmem [resolvable:$true] %s174
      %s176 = sshll.u32 %s8, 4
      %s177 = int_to_ptr.hbm [resolvable:$true] %s176
      %179 = dma.vmem_to_hbm [thread:$0]  %s175, 128, %s177, [#allocation4]
    $region45: #{tpu_custom_call.1} parent=1 // pred_fallthru
      _
    // Predicated region
    $region46: #{tpu_custom_call.1} parent=1 // pred_check
      _
    $region47: #{tpu_custom_call.1} parent=1 // pred_check_branch
      %181 = sbr.rel (0) target = $region49
    $region48: #{tpu_custom_call.1} parent=1 // pred_region
      %183 = dma.done [#allocation4], 128
    $region49: #{tpu_custom_call.1} parent=1 // pred_fallthru
      _
    %184 = vsyncpa [#allocation3], 1
    %185 = vsyncpa [#allocation4], 1
    %186 = vsyncpa [#allocation5], 1

</llo_original>
